<compile_context>
chip_gen: v7x
topology: tpu7x:2x2x1
jax: 0.10.0
libtpu: 0.0.40
codegen_flags: <defaults>
</compile_context>

<pallas_src>
import jax
import jax.numpy as jnp
from jax import lax
from jax.experimental import pallas as pl
from jax.experimental.pallas import tpu as pltpu

# ---- model hyper-parameters (small, consistent with the module) ----
BATCH = 2
SEQ = 8
D_MODEL = 32
NUM_HEADS = 4
D_K = D_MODEL // NUM_HEADS
D_FF = 64
EPS = 1e-6
BS = BATCH * SEQ           # 16 folded activation rows (batch folded onto sublanes)
HBS = NUM_HEADS * BS       # 64 packed key/value rows (head-major)

# ---- packed-slab layout ----
# w_slab (D_MODEL, 512): every section starts at a 128-lane boundary.
W_QKV_L0 = 0      # lanes   0: 96   [Wq | Wk | Wv]
W_O_L0 = 128      # lanes 128:160   Wo
W_1_L0 = 256      # lanes 256:320   W1
W_2T_L0 = 384     # lanes 384:448   W2^T
W_LANES = 512

# c_slab (152, 96): constants + LN/bias rows; every slice starts at lane 0 and a
# sublane offset that is a multiple of 8.
HEADMASK_R0 = 0    # rows   0: 64, lanes 0:32  head indicator for K~ / V~
ATTNBIAS_R0 = 64   # rows  64: 80, lanes 0:64  additive cross-batch mask (0 / -1e30)
SEG_R0 = 80        # rows  80:144, lanes 0: 4  packed-column -> head indicator
VEC_R0 = 144       # rows 144:152              LN gains/biases + linear biases
C_ROWS, C_LANES = 152, 96


def encoder_layer_kernel(x_ref, w_ref, c_ref, o_ref):
    f32 = jnp.float32
    x = x_ref[...].astype(f32)                                   # (BS, D)

    # ---- unpack weight slab (128-lane aligned static slices; free views) ----
    w_qkv = w_ref[:, W_QKV_L0:W_QKV_L0 + 3 * D_MODEL]             # (D, 3D)
    w_o = w_ref[:, W_O_L0:W_O_L0 + D_MODEL]                       # (D, D)
    w_1 = w_ref[:, W_1_L0:W_1_L0 + D_FF]                          # (D, D_FF)
    w_2t = w_ref[:, W_2T_L0:W_2T_L0 + D_FF]                       # (D, D_FF) == W2^T

    # ---- unpack constant slab ----
    head_mask = c_ref[HEADMASK_R0:HEADMASK_R0 + HBS, 0:D_MODEL]   # (64, 32) 0/1
    attn_bias = c_ref[ATTNBIAS_R0:ATTNBIAS_R0 + BS, 0:HBS]        # (16, 64) 0/-1e30
    seg = c_ref[SEG_R0:SEG_R0 + HBS, 0:NUM_HEADS]                 # (64, 4)  0/1

    ln1_a = c_ref[VEC_R0 + 0:VEC_R0 + 1, 0:D_MODEL]
    ln1_b = c_ref[VEC_R0 + 1:VEC_R0 + 2, 0:D_MODEL]
    b_qkv = c_ref[VEC_R0 + 2:VEC_R0 + 3, 0:3 * D_MODEL]
    b_o = c_ref[VEC_R0 + 3:VEC_R0 + 4, 0:D_MODEL]
    ln2_a = c_ref[VEC_R0 + 4:VEC_R0 + 5, 0:D_MODEL]
    ln2_b = c_ref[VEC_R0 + 5:VEC_R0 + 6, 0:D_MODEL]
    b_1 = c_ref[VEC_R0 + 6:VEC_R0 + 7, 0:D_FF]
    b_2 = c_ref[VEC_R0 + 7:VEC_R0 + 8, 0:D_MODEL]

    def layernorm(v, a, b):
        mean = jnp.mean(v, axis=-1, keepdims=True)
        # torch.std default is unbiased (divide by N-1); denominator is (std + eps)
        var = jnp.sum((v - mean) ** 2, axis=-1, keepdims=True) * (1.0 / (D_MODEL - 1))
        std = jnp.sqrt(var)
        return a * (v - mean) / (std + EPS) + b

    trans_b = (((1,), (1,)), ((), ()))   # contract last dims (MXU trans_b path)

    # ---------------- sublayer 0: x + self_attn(norm(x)) ----------------
    xn = layernorm(x, ln1_a, ln1_b)
    qkv = jnp.dot(xn, w_qkv, preferred_element_type=f32) + b_qkv  # (BS, 3D)
    q = qkv[:, 0:D_MODEL] * (D_K ** -0.5)                         # fold 1/sqrt(dk) once
    k = qkv[:, D_MODEL:2 * D_MODEL]
    v = qkv[:, 2 * D_MODEL:3 * D_MODEL]

    # head-packed (block-masked) keys / values: row h*BS+j keeps only head h's lanes
    kp = jnp.concatenate([k] * NUM_HEADS, axis=0) * head_mask     # (HBS, D)
    vp = jnp.concatenate([v] * NUM_HEADS, axis=0) * head_mask     # (HBS, D)

    # all head scores in one matmul; additive mask keeps attention within a batch elem
    s = lax.dot_general(q, kp, trans_b, preferred_element_type=f32) + attn_bias  # (BS, HBS)
    m = jnp.max(s, axis=-1, keepdims=True)        # global row max (constant cancels -> exact)
    e = jnp.exp(s - m)                            # one EUP pass over (16, 64)

    denom = jnp.dot(e, seg, preferred_element_type=f32)           # (BS, H) per-head sums
    recip = 1.0 / denom                                           # exact division
    recip64 = lax.dot_general(recip, seg, trans_b, preferred_element_type=f32)  # (BS, HBS)
    p = e * recip64                                                # normalized packed probs

    concat = jnp.dot(p, vp, preferred_element_type=f32)           # (BS, D) == concat(heads)
    attn = jnp.dot(concat, w_o, preferred_element_type=f32) + b_o
    x = x + attn                                                   # residual (dropout = id)

    # ---------------- sublayer 1: x + feed_forward(norm(x)) ----------------
    xn2 = layernorm(x, ln2_a, ln2_b)
    h1 = jnp.maximum(jnp.dot(xn2, w_1, preferred_element_type=f32) + b_1, 0.0)
    ff = lax.dot_general(h1, w_2t, trans_b, preferred_element_type=f32) + b_2

    o_ref[...] = (x + ff).astype(o_ref.dtype)


def encoder_layer(x, params):
    B, S, D = x.shape
    assert (B, S, D) == (BATCH, SEQ, D_MODEL)
    (ln1_a, ln1_b, wq, bq, wk, bk, wv, bv, wo, bo,
     ln2_a, ln2_b, w1, b1, w2, b2) = params

    # ---- weight slab: each section 128-lane aligned ----
    w_slab = jnp.zeros((D, W_LANES), jnp.float32)
    w_slab = w_slab.at[:, W_QKV_L0:W_QKV_L0 + 3 * D].set(jnp.concatenate([wq, wk, wv], axis=1))
    w_slab = w_slab.at[:, W_O_L0:W_O_L0 + D].set(wo)
    w_slab = w_slab.at[:, W_1_L0:W_1_L0 + D_FF].set(w1)
    w_slab = w_slab.at[:, W_2T_L0:W_2T_L0 + D_FF].set(w2.T)

    # ---- constant slab: masks / indicators / LN+bias rows ----
    rows = jnp.arange(HBS)
    head_mask = ((rows[:, None] // BS) == (jnp.arange(D)[None, :] // D_K)).astype(jnp.float32)
    qi = jnp.arange(BS)
    same_batch = (qi[:, None] // SEQ) == ((rows[None, :] % BS) // SEQ)
    attn_bias = jnp.where(same_batch, 0.0, -1e30).astype(jnp.float32)
    seg = ((rows[:, None] // BS) == jnp.arange(NUM_HEADS)[None, :]).astype(jnp.float32)

    def row(v):
        v = v.reshape(-1)
        return jnp.pad(v, (0, C_LANES - v.shape[0]))

    vec_rows = jnp.stack([
        row(ln1_a), row(ln1_b),
        row(jnp.concatenate([bq.reshape(-1), bk.reshape(-1), bv.reshape(-1)])),
        row(bo), row(ln2_a), row(ln2_b), row(b1), row(b2),
    ])

    c_slab = jnp.zeros((C_ROWS, C_LANES), jnp.float32)
    c_slab = c_slab.at[HEADMASK_R0:HEADMASK_R0 + HBS, 0:D].set(head_mask)
    c_slab = c_slab.at[ATTNBIAS_R0:ATTNBIAS_R0 + BS, 0:HBS].set(attn_bias)
    c_slab = c_slab.at[SEG_R0:SEG_R0 + HBS, 0:NUM_HEADS].set(seg)
    c_slab = c_slab.at[VEC_R0:VEC_R0 + 8, :].set(vec_rows)

    x2d = x.reshape(B * S, D)

    # advisory cost estimate for the XLA scheduler
    flops = 2 * (BS * D * 3 * D + BS * D * HBS + BS * HBS * NUM_HEADS
                 + BS * NUM_HEADS * HBS + BS * HBS * D + BS * D * D
                 + BS * D * D_FF + BS * D_FF * D)
    bytes_accessed = 4 * (2 * x2d.size + w_slab.size + c_slab.size)
    transcendentals = BS * HBS + 2 * BS

    vmem = pl.BlockSpec(memory_space=pltpu.MemorySpace.VMEM)
    out = pl.pallas_call(
        encoder_layer_kernel,
        out_shape=jax.ShapeDtypeStruct((B * S, D), x.dtype),
        in_specs=[vmem, vmem, vmem],
        out_specs=vmem,
        cost_estimate=pl.CostEstimate(flops=flops,
                                      transcendentals=transcendentals,
                                      bytes_accessed=bytes_accessed),
    )(x2d, w_slab, c_slab)
    return out.reshape(B, S, D)


def make_params(key):
    """Deterministic synthetic parameters (biases/LN params as (1, D) rows)."""
    ks = jax.random.split(key, 8)

    def lin(k, din, dout):
        w = jax.random.normal(k, (din, dout), jnp.float32) * (1.0 / jnp.sqrt(din))
        b = jnp.zeros((1, dout), jnp.float32)
        return w, b

    wq, bq = lin(ks[0], D_MODEL, D_MODEL)
    wk, bk = lin(ks[1], D_MODEL, D_MODEL)
    wv, bv = lin(ks[2], D_MODEL, D_MODEL)
    wo, bo = lin(ks[3], D_MODEL, D_MODEL)
    w1, b1 = lin(ks[4], D_MODEL, D_FF)
    w2, b2 = lin(ks[5], D_FF, D_MODEL)
    ln1_a = jnp.ones((1, D_MODEL), jnp.float32)
    ln1_b = jnp.zeros((1, D_MODEL), jnp.float32)
    ln2_a = jnp.ones((1, D_MODEL), jnp.float32)
    ln2_b = jnp.zeros((1, D_MODEL), jnp.float32)
    return [ln1_a, ln1_b, wq, bq, wk, bk, wv, bv, wo, bo,
            ln2_a, ln2_b, w1, b1, w2, b2]


def reference(x, params):
    """Pure-JAX reference with the module's exact semantics."""
    (ln1_a, ln1_b, wq, bq, wk, bk, wv, bv, wo, bo,
     ln2_a, ln2_b, w1, b1, w2, b2) = params

    def layernorm(v, a, b):
        mean = jnp.mean(v, axis=-1, keepdims=True)
        var = jnp.sum((v - mean) ** 2, axis=-1, keepdims=True) / (D_MODEL - 1)
        return a[0] * (v - mean) / (jnp.sqrt(var) + EPS) + b[0]

    def mha(xn):
        B, S, D = xn.shape
        q = xn @ wq + bq[0]
        k = xn @ wk + bk[0]
        v = xn @ wv + bv[0]

        def split(t):  # (B,S,D) -> (B,H,S,dk)
            return t.reshape(B, S, NUM_HEADS, D_K).transpose(0, 2, 1, 3)

        qh, kh, vh = split(q), split(k), split(v)
        sc = jnp.einsum('bhqd,bhkd->bhqk', qh, kh) / jnp.sqrt(jnp.float32(D_K))
        p = jax.nn.softmax(sc, axis=-1)
        o = jnp.einsum('bhqk,bhkd->bhqd', p, vh).transpose(0, 2, 1, 3).reshape(B, S, D)
        return o @ wo + bo[0]

    x1 = x + mha(layernorm(x, ln1_a, ln1_b))
    xn2 = layernorm(x1, ln2_a, ln2_b)
    ff = jnp.maximum(xn2 @ w1 + b1[0], 0.0) @ w2 + b2[0]
    return x1 + ff


if __name__ == "__main__":
    key = jax.random.PRNGKey(0)
    kx, kp = jax.random.split(key)
    x = jax.random.normal(kx, (BATCH, SEQ, D_MODEL), jnp.float32)
    params = make_params(kp)

    out = jax.block_until_ready(encoder_layer(x, params))
    assert out.shape == (BATCH, SEQ, D_MODEL)

    # full-f32 reference; with the approx reciprocal removed the kernel matches at
    # ~1e-5 level, tolerance leaves headroom for MXU f32 pass differences.
    with jax.default_matmul_precision("float32"):
        ref = reference(x, params)
    err = jnp.max(jnp.abs(out - ref))
    assert jnp.allclose(out, ref, atol=1e-3, rtol=1e-3), f"max abs err {err}"
    print("KERNEL_OK")
</pallas_src>

<mosaic_0001>
module attributes {stable_mosaic.version = 11 : i64} {
  func.func @encoder_layer_kernel(%arg0: memref<16x32xf32, #tpu.memory_space<vmem>>, %arg1: memref<32x512xf32, #tpu.memory_space<vmem>>, %arg2: memref<152x96xf32, #tpu.memory_space<vmem>>, %arg3: memref<16x32xf32, #tpu.memory_space<vmem>>) attributes {dimension_semantics = [], scalar_prefetch = 0 : i64, scratch_operands = 0 : i64, tpu.core_type = #tpu.core_type<tc>} {
    %c0 = arith.constant 0 : index
    %c0_0 = arith.constant 0 : index
    %0 = vector.load %arg0[%c0, %c0_0] : memref<16x32xf32, #tpu.memory_space<vmem>>, vector<16x32xf32>
    %c0_1 = arith.constant 0 : index
    %c0_2 = arith.constant 0 : index
    %1 = vector.load %arg1[%c0_1, %c0_2] : memref<32x512xf32, #tpu.memory_space<vmem>>, vector<32x96xf32>
    %c0_3 = arith.constant 0 : index
    %c128 = arith.constant 128 : index
    %2 = vector.load %arg1[%c0_3, %c128] : memref<32x512xf32, #tpu.memory_space<vmem>>, vector<32x32xf32>
    %c0_4 = arith.constant 0 : index
    %c256 = arith.constant 256 : index
    %3 = vector.load %arg1[%c0_4, %c256] : memref<32x512xf32, #tpu.memory_space<vmem>>, vector<32x64xf32>
    %c0_5 = arith.constant 0 : index
    %c384 = arith.constant 384 : index
    %4 = vector.load %arg1[%c0_5, %c384] : memref<32x512xf32, #tpu.memory_space<vmem>>, vector<32x64xf32>
    %c0_6 = arith.constant 0 : index
    %c0_7 = arith.constant 0 : index
    %5 = vector.load %arg2[%c0_6, %c0_7] : memref<152x96xf32, #tpu.memory_space<vmem>>, vector<64x32xf32>
    %c64 = arith.constant 64 : index
    %c0_8 = arith.constant 0 : index
    %6 = vector.load %arg2[%c64, %c0_8] : memref<152x96xf32, #tpu.memory_space<vmem>>, vector<16x64xf32>
    %c80 = arith.constant 80 : index
    %c0_9 = arith.constant 0 : index
    %7 = vector.load %arg2[%c80, %c0_9] : memref<152x96xf32, #tpu.memory_space<vmem>>, vector<64x4xf32>
    %c144 = arith.constant 144 : index
    %c0_10 = arith.constant 0 : index
    %8 = vector.load %arg2[%c144, %c0_10] : memref<152x96xf32, #tpu.memory_space<vmem>>, vector<1x32xf32>
    %c145 = arith.constant 145 : index
    %c0_11 = arith.constant 0 : index
    %9 = vector.load %arg2[%c145, %c0_11] : memref<152x96xf32, #tpu.memory_space<vmem>>, vector<1x32xf32>
    %c146 = arith.constant 146 : index
    %c0_12 = arith.constant 0 : index
    %10 = vector.load %arg2[%c146, %c0_12] : memref<152x96xf32, #tpu.memory_space<vmem>>, vector<1x96xf32>
    %c147 = arith.constant 147 : index
    %c0_13 = arith.constant 0 : index
    %11 = vector.load %arg2[%c147, %c0_13] : memref<152x96xf32, #tpu.memory_space<vmem>>, vector<1x32xf32>
    %c148 = arith.constant 148 : index
    %c0_14 = arith.constant 0 : index
    %12 = vector.load %arg2[%c148, %c0_14] : memref<152x96xf32, #tpu.memory_space<vmem>>, vector<1x32xf32>
    %c149 = arith.constant 149 : index
    %c0_15 = arith.constant 0 : index
    %13 = vector.load %arg2[%c149, %c0_15] : memref<152x96xf32, #tpu.memory_space<vmem>>, vector<1x32xf32>
    %c150 = arith.constant 150 : index
    %c0_16 = arith.constant 0 : index
    %14 = vector.load %arg2[%c150, %c0_16] : memref<152x96xf32, #tpu.memory_space<vmem>>, vector<1x64xf32>
    %c151 = arith.constant 151 : index
    %c0_17 = arith.constant 0 : index
    %15 = vector.load %arg2[%c151, %c0_17] : memref<152x96xf32, #tpu.memory_space<vmem>>, vector<1x32xf32>
    %cst = arith.constant dense<0.000000e+00> : vector<16xf32>
    %16 = vector.multi_reduction <add>, %0, %cst [1] : vector<16x32xf32> to vector<16xf32>
    %17 = vector.shape_cast %16 : vector<16xf32> to vector<16x1xf32>
    %cst_18 = arith.constant 3.200000e+01 : f32
    %18 = vector.broadcast %cst_18 : f32 to vector<16x1xf32>
    %19 = arith.divf %17, %18 : vector<16x1xf32>
    %20 = vector.broadcast %19 : vector<16x1xf32> to vector<16x32xf32>
    %21 = arith.subf %0, %20 : vector<16x32xf32>
    %22 = arith.mulf %21, %21 : vector<16x32xf32>
    %cst_19 = arith.constant dense<0.000000e+00> : vector<16xf32>
    %23 = vector.multi_reduction <add>, %22, %cst_19 [1] : vector<16x32xf32> to vector<16xf32>
    %24 = vector.shape_cast %23 : vector<16xf32> to vector<16x1xf32>
    %cst_20 = arith.constant 0.0322580636 : f32
    %25 = vector.broadcast %cst_20 : f32 to vector<16x1xf32>
    %26 = arith.mulf %24, %25 : vector<16x1xf32>
    %27 = math.sqrt %26 : vector<16x1xf32>
    %28 = vector.broadcast %19 : vector<16x1xf32> to vector<16x32xf32>
    %29 = arith.subf %0, %28 : vector<16x32xf32>
    %30 = vector.broadcast %8 : vector<1x32xf32> to vector<16x32xf32>
    %31 = arith.mulf %30, %29 : vector<16x32xf32>
    %cst_21 = arith.constant 9.99999997E-7 : f32
    %32 = vector.broadcast %cst_21 : f32 to vector<16x1xf32>
    %33 = arith.addf %27, %32 : vector<16x1xf32>
    %34 = vector.broadcast %33 : vector<16x1xf32> to vector<16x32xf32>
    %35 = arith.divf %31, %34 : vector<16x32xf32>
    %36 = vector.broadcast %9 : vector<1x32xf32> to vector<16x32xf32>
    %37 = arith.addf %35, %36 : vector<16x32xf32>
    %cst_22 = arith.constant dense<0.000000e+00> : vector<16x96xf32>
    %38 = tpu.matmul %37, %1, %cst_22 {dimension_numbers = #tpu.dot_dimension_numbers<[1], [0], [0], [1], [0, 0, 1, 1], [], []>} : vector<16x32xf32>, vector<32x96xf32>, vector<16x96xf32> -> vector<16x96xf32>
    %39 = vector.broadcast %10 : vector<1x96xf32> to vector<16x96xf32>
    %40 = arith.addf %38, %39 : vector<16x96xf32>
    %41 = vector.extract_strided_slice %40 {offsets = [0, 0], sizes = [16, 32], strides = [1, 1]} : vector<16x96xf32> to vector<16x32xf32>
    %cst_23 = arith.constant 0.353553385 : f32
    %42 = vector.broadcast %cst_23 : f32 to vector<16x32xf32>
    %43 = arith.mulf %41, %42 : vector<16x32xf32>
    %44 = vector.extract_strided_slice %40 {offsets = [0, 32], sizes = [16, 32], strides = [1, 1]} : vector<16x96xf32> to vector<16x32xf32>
    %45 = vector.extract_strided_slice %40 {offsets = [0, 64], sizes = [16, 32], strides = [1, 1]} : vector<16x96xf32> to vector<16x32xf32>
    %46 = tpu.concatenate %44, %44, %44, %44 in 0 : vector<16x32xf32>, vector<16x32xf32>, vector<16x32xf32>, vector<16x32xf32> -> vector<64x32xf32>
    %47 = arith.mulf %46, %5 : vector<64x32xf32>
    %48 = tpu.concatenate %45, %45, %45, %45 in 0 : vector<16x32xf32>, vector<16x32xf32>, vector<16x32xf32>, vector<16x32xf32> -> vector<64x32xf32>
    %49 = arith.mulf %48, %5 : vector<64x32xf32>
    %cst_24 = arith.constant dense<0.000000e+00> : vector<16x64xf32>
    %50 = tpu.matmul %43, %47, %cst_24 {dimension_numbers = #tpu.dot_dimension_numbers<[1], [1], [0], [0], [0, 0, 1, 0], [], []>} : vector<16x32xf32>, vector<64x32xf32>, vector<16x64xf32> -> vector<16x64xf32>
    %51 = arith.addf %50, %6 : vector<16x64xf32>
    %cst_25 = arith.constant dense<0xFF800000> : vector<16xf32>
    %52 = vector.multi_reduction <maximumf>, %51, %cst_25 [1] : vector<16x64xf32> to vector<16xf32>
    %53 = vector.shape_cast %52 : vector<16xf32> to vector<16x1xf32>
    %54 = vector.broadcast %53 : vector<16x1xf32> to vector<16x64xf32>
    %55 = arith.subf %51, %54 : vector<16x64xf32>
    %56 = math.exp %55 : vector<16x64xf32>
    %cst_26 = arith.constant dense<0.000000e+00> : vector<16x4xf32>
    %57 = tpu.matmul %56, %7, %cst_26 {dimension_numbers = #tpu.dot_dimension_numbers<[1], [0], [0], [1], [0, 0, 1, 1], [], []>} : vector<16x64xf32>, vector<64x4xf32>, vector<16x4xf32> -> vector<16x4xf32>
    %cst_27 = arith.constant 1.000000e+00 : f32
    %58 = vector.broadcast %cst_27 : f32 to vector<16x4xf32>
    %59 = arith.divf %58, %57 : vector<16x4xf32>
    %cst_28 = arith.constant dense<0.000000e+00> : vector<16x64xf32>
    %60 = tpu.matmul %59, %7, %cst_28 {dimension_numbers = #tpu.dot_dimension_numbers<[1], [1], [0], [0], [0, 0, 1, 0], [], []>} : vector<16x4xf32>, vector<64x4xf32>, vector<16x64xf32> -> vector<16x64xf32>
    %61 = arith.mulf %56, %60 : vector<16x64xf32>
    %cst_29 = arith.constant dense<0.000000e+00> : vector<16x32xf32>
    %62 = tpu.matmul %61, %49, %cst_29 {dimension_numbers = #tpu.dot_dimension_numbers<[1], [0], [0], [1], [0, 0, 1, 1], [], []>} : vector<16x64xf32>, vector<64x32xf32>, vector<16x32xf32> -> vector<16x32xf32>
    %cst_30 = arith.constant dense<0.000000e+00> : vector<16x32xf32>
    %63 = tpu.matmul %62, %2, %cst_30 {dimension_numbers = #tpu.dot_dimension_numbers<[1], [0], [0], [1], [0, 0, 1, 1], [], []>} : vector<16x32xf32>, vector<32x32xf32>, vector<16x32xf32> -> vector<16x32xf32>
    %64 = vector.broadcast %11 : vector<1x32xf32> to vector<16x32xf32>
    %65 = arith.addf %63, %64 : vector<16x32xf32>
    %66 = arith.addf %0, %65 : vector<16x32xf32>
    %cst_31 = arith.constant dense<0.000000e+00> : vector<16xf32>
    %67 = vector.multi_reduction <add>, %66, %cst_31 [1] : vector<16x32xf32> to vector<16xf32>
    %68 = vector.shape_cast %67 : vector<16xf32> to vector<16x1xf32>
    %cst_32 = arith.constant 3.200000e+01 : f32
    %69 = vector.broadcast %cst_32 : f32 to vector<16x1xf32>
    %70 = arith.divf %68, %69 : vector<16x1xf32>
    %71 = vector.broadcast %70 : vector<16x1xf32> to vector<16x32xf32>
    %72 = arith.subf %66, %71 : vector<16x32xf32>
    %73 = arith.mulf %72, %72 : vector<16x32xf32>
    %cst_33 = arith.constant dense<0.000000e+00> : vector<16xf32>
    %74 = vector.multi_reduction <add>, %73, %cst_33 [1] : vector<16x32xf32> to vector<16xf32>
    %75 = vector.shape_cast %74 : vector<16xf32> to vector<16x1xf32>
    %cst_34 = arith.constant 0.0322580636 : f32
    %76 = vector.broadcast %cst_34 : f32 to vector<16x1xf32>
    %77 = arith.mulf %75, %76 : vector<16x1xf32>
    %78 = math.sqrt %77 : vector<16x1xf32>
    %79 = vector.broadcast %70 : vector<16x1xf32> to vector<16x32xf32>
    %80 = arith.subf %66, %79 : vector<16x32xf32>
    %81 = vector.broadcast %12 : vector<1x32xf32> to vector<16x32xf32>
    %82 = arith.mulf %81, %80 : vector<16x32xf32>
    %cst_35 = arith.constant 9.99999997E-7 : f32
    %83 = vector.broadcast %cst_35 : f32 to vector<16x1xf32>
    %84 = arith.addf %78, %83 : vector<16x1xf32>
    %85 = vector.broadcast %84 : vector<16x1xf32> to vector<16x32xf32>
    %86 = arith.divf %82, %85 : vector<16x32xf32>
    %87 = vector.broadcast %13 : vector<1x32xf32> to vector<16x32xf32>
    %88 = arith.addf %86, %87 : vector<16x32xf32>
    %cst_36 = arith.constant dense<0.000000e+00> : vector<16x64xf32>
    %89 = tpu.matmul %88, %3, %cst_36 {dimension_numbers = #tpu.dot_dimension_numbers<[1], [0], [0], [1], [0, 0, 1, 1], [], []>} : vector<16x32xf32>, vector<32x64xf32>, vector<16x64xf32> -> vector<16x64xf32>
    %90 = vector.broadcast %14 : vector<1x64xf32> to vector<16x64xf32>
    %91 = arith.addf %89, %90 : vector<16x64xf32>
    %cst_37 = arith.constant 0.000000e+00 : f32
    %92 = vector.broadcast %cst_37 : f32 to vector<16x64xf32>
    %93 = arith.maximumf %91, %92 : vector<16x64xf32>
    %cst_38 = arith.constant dense<0.000000e+00> : vector<16x32xf32>
    %94 = tpu.matmul %93, %4, %cst_38 {dimension_numbers = #tpu.dot_dimension_numbers<[1], [1], [0], [0], [0, 0, 1, 0], [], []>} : vector<16x64xf32>, vector<32x64xf32>, vector<16x32xf32> -> vector<16x32xf32>
    %95 = vector.broadcast %15 : vector<1x32xf32> to vector<16x32xf32>
    %96 = arith.addf %94, %95 : vector<16x32xf32>
    %97 = arith.addf %66, %96 : vector<16x32xf32>
    %c0_39 = arith.constant 0 : index
    %c0_40 = arith.constant 0 : index
    %98 = vector.load %arg3[%c0_39, %c0_40] : memref<16x32xf32, #tpu.memory_space<vmem>>, vector<16x32xf32>
    tpu.vector_store %arg3[%c0_39, %c0_40], %97 {strides = array<i32>} : memref<16x32xf32, #tpu.memory_space<vmem>>, vector<16x32xf32>,
    return
  }
}

</mosaic_0001>

<llo_original>
// kernel: tpu_custom_call.1
$region0: #{tpu_custom_call.1}
  #allocation0 [shape = 'u32[]', space=smem, size = 0x4, offset = 0x4, fixed_abs, tag = 'smem constant byte address 0x4 - core index']
  #allocation1 [shape = 'u32[144,128]{1,0:T(1,128)}', space=vmem, size = 0x12000, scoped, tag = 'internal scratch']
  %s0 = inlined_call_operand.hbm [shape: f32[16,32], index: 0, kind: input, shape index: {}]
  %s1 = inlined_call_operand.hbm [shape: f32[32,512], index: 1, kind: input, shape index: {}]
  %s2 = inlined_call_operand.hbm [shape: f32[152,96], index: 2, kind: input, shape index: {}]
  %s3 = inlined_call_operand.hbm [shape: f32[16,32], index: 3, kind: output, shape index: {}]
  %s4 = sld [smem:[#allocation0]]
  $region34: #{tpu_custom_call.1} parent=0
    _
  %s6 = ssub.s32 1, %s4
  %s7 = scalar_select 0, %s6, %s4
  $region1: #{tpu_custom_call.1} parent=0
    #allocation2 [shape = 'u8[8192]{0}', space=vmem, size = 0x2000, scoped, tag = 'input window, operand 0, single buffered']
    #allocation3 [shape = 's32[1]{0}', space=sflag, size = 0x4, scoped, tag = 'scoped memory for tpu_custom_call.1']
    #allocation4 [shape = 's32[1]{0}', space=sflag, size = 0x4, scoped, tag = 'scoped memory for tpu_custom_call.1']
    #allocation5 [shape = 'u8[65536]{0}', space=vmem, size = 0x10000, scoped, tag = 'input window, operand 1, single buffered']
    #allocation6 [shape = 's32[1]{0}', space=sflag, size = 0x4, scoped, tag = 'scoped memory for tpu_custom_call.1']
    #allocation7 [shape = 'u8[77824]{0}', space=vmem, size = 0x13000, scoped, tag = 'input window, operand 2, single buffered']
    #allocation8 [shape = 'u8[8192]{0}', space=vmem, size = 0x2000, scoped, tag = 'output window, operand 0, single buffered']
    %8 = vsyncpa [#allocation3], 0
    %9 = vsyncpa [#allocation6], 0
    %10 = vsyncpa [#allocation4], 0
    // Predicated region
    $region2: #{tpu_custom_call.1} parent=1 // pred_check
      _
    $region3: #{tpu_custom_call.1} parent=1 // pred_check_branch
      %12 = sbr.rel (0) target = $region5
    $region4: #{tpu_custom_call.1} parent=1 // pred_region
      %s14 = ssub.s32 256, 256
      %15 = vsyncadd [#allocation3], %s14
      %s16 = sshll.u32 [#allocation2], 4
      %s17 = int_to_ptr.vmem [resolvable:$true] %s16
      %22 = dma.hbm_to_vmem [thread:$0]  %s0, 256, %s17, [#allocation3], 128, 128, 8
    $region5: #{tpu_custom_call.1} parent=1 // pred_fallthru
      _
    // Predicated region
    $region6: #{tpu_custom_call.1} parent=1 // pred_check
      _
    $region7: #{tpu_custom_call.1} parent=1 // pred_check_branch
      %24 = sbr.rel (0) target = $region9
    $region8: #{tpu_custom_call.1} parent=1 // pred_region
      %s26 = ssub.s32 2048, 2048
      %27 = vsyncadd [#allocation6], %s26
      %s28 = sshll.u32 [#allocation5], 4
      %s29 = int_to_ptr.vmem [resolvable:$true] %s28
      %34 = dma.hbm_to_vmem [thread:$0]  %s1, 2048, %s29, [#allocation6], 512, 512, 32
    $region9: #{tpu_custom_call.1} parent=1 // pred_fallthru
      _
    // Predicated region
    $region10: #{tpu_custom_call.1} parent=1 // pred_check
      _
    $region11: #{tpu_custom_call.1} parent=1 // pred_check_branch
      %36 = sbr.rel (0) target = $region13
    $region12: #{tpu_custom_call.1} parent=1 // pred_region
      %s38 = ssub.s32 2432, 2432
      %39 = vsyncadd [#allocation6], %s38
      %s40 = sshll.u32 [#allocation7], 4
      %s41 = int_to_ptr.vmem [resolvable:$true] %s40
      %46 = dma.hbm_to_vmem [thread:$0]  %s2, 2432, %s41, [#allocation6], 128, 128, 8
    $region13: #{tpu_custom_call.1} parent=1 // pred_fallthru
      _
    // Predicated region
    $region14: #{tpu_custom_call.1} parent=1 // pred_check
      _
    $region15: #{tpu_custom_call.1} parent=1 // pred_check_branch
      %48 = sbr.rel (0) target = $region17
    $region16: #{tpu_custom_call.1} parent=1 // pred_region
      %49 = dma.done [#allocation3], 256
    $region17: #{tpu_custom_call.1} parent=1 // pred_fallthru
      _
    // Predicated region
    $region18: #{tpu_custom_call.1} parent=1 // pred_check
      _
    $region19: #{tpu_custom_call.1} parent=1 // pred_check_branch
      %51 = sbr.rel (0) target = $region21
    $region20: #{tpu_custom_call.1} parent=1 // pred_region
      %52 = dma.done [#allocation6], 2048
    $region21: #{tpu_custom_call.1} parent=1 // pred_fallthru
      _
    // Predicated region
    $region22: #{tpu_custom_call.1} parent=1 // pred_check
      _
    $region23: #{tpu_custom_call.1} parent=1 // pred_check_branch
      %54 = sbr.rel (0) target = $region25
    $region24: #{tpu_custom_call.1} parent=1 // pred_region
      %55 = dma.done [#allocation6], 2432
    $region25: #{tpu_custom_call.1} parent=1 // pred_fallthru
      _
    %v56 = vld [vmem:[#allocation2] sm:$0xff]
    %v57 = vld [vmem:[#allocation2 + $0x8] sm:$0xff]
    %v58 = vld [vmem:[#allocation5] sm:$0xff]
    %v59 = vld [vmem:[#allocation5 + $0x20] sm:$0xff]
    %v60 = vld [vmem:[#allocation5 + $0x40] sm:$0xff]
    %v61 = vld [vmem:[#allocation5 + $0x60] sm:$0xff]
    %v62 = vld [vmem:[#allocation5 + $0x8] sm:$0xff]
    %v63 = vld [vmem:[#allocation5 + $0x28] sm:$0xff]
    %v64 = vld [vmem:[#allocation5 + $0x48] sm:$0xff]
    %v65 = vld [vmem:[#allocation5 + $0x68] sm:$0xff]
    %v66 = vld [vmem:[#allocation5 + $0x10] sm:$0xff]
    %v67 = vld [vmem:[#allocation5 + $0x30] sm:$0xff]
    %v68 = vld [vmem:[#allocation5 + $0x50] sm:$0xff]
    %v69 = vld [vmem:[#allocation5 + $0x70] sm:$0xff]
    %v70 = vld [vmem:[#allocation5 + $0x18] sm:$0xff]
    %v71 = vld [vmem:[#allocation5 + $0x38] sm:$0xff]
    %v72 = vld [vmem:[#allocation5 + $0x58] sm:$0xff]
    %v73 = vld [vmem:[#allocation5 + $0x78] sm:$0xff]
    %v74 = vld [vmem:[#allocation7] sm:$0xff]
    %v75 = vld [vmem:[#allocation7 + $0x8] sm:$0xff]
    %v76 = vld [vmem:[#allocation7 + $0x10] sm:$0xff]
    %v77 = vld [vmem:[#allocation7 + $0x18] sm:$0xff]
    %v78 = vld [vmem:[#allocation7 + $0x20] sm:$0xff]
    %v79 = vld [vmem:[#allocation7 + $0x28] sm:$0xff]
    %v80 = vld [vmem:[#allocation7 + $0x30] sm:$0xff]
    %v81 = vld [vmem:[#allocation7 + $0x38] sm:$0xff]
    %v82 = vld [vmem:[#allocation7 + $0x40] sm:$0xff]
    %v83 = vld [vmem:[#allocation7 + $0x48] sm:$0xff]
    %v84 = vld [vmem:[#allocation7 + $0x50] sm:$0xff]
    %v85 = vld [vmem:[#allocation7 + $0x58] sm:$0xff]
    %v86 = vld [vmem:[#allocation7 + $0x60] sm:$0xff]
    %v87 = vld [vmem:[#allocation7 + $0x68] sm:$0xff]
    %v88 = vld [vmem:[#allocation7 + $0x70] sm:$0xff]
    %v89 = vld [vmem:[#allocation7 + $0x78] sm:$0xff]
    %v90 = vld [vmem:[#allocation7 + $0x80] sm:$0xff]
    %v91 = vld [vmem:[#allocation7 + $0x88] sm:$0xff]
    %v92 = vld [vmem:[#allocation7 + $0x90] sm:$0x1]
    %v93 = vld [vmem:[#allocation7 + $0x91] sm:$0x1]
    %v94 = vld [vmem:[#allocation7 + $0x92] sm:$0x1]
    %v95 = vld [vmem:[#allocation7 + $0x93] sm:$0x1]
    %v96 = vld [vmem:[#allocation7 + $0x94] sm:$0x1]
    %v97 = vld [vmem:[#allocation7 + $0x95] sm:$0x1]
    %v98 = vld [vmem:[#allocation7 + $0x96] sm:$0x1]
    %v99 = vld [vmem:[#allocation7 + $0x97] sm:$0x1]
    %vm100 = vcmask 261120
    %v101 = vsel %vm100, %v56, 0.0
    %102 = vadd.xlane.f32.xlu0 %v101
    %v103 = vpop.xlane.xlu0 %102
    %v104 = vsel %vm100, %v57, 0.0
    %105 = vadd.xlane.f32.xlu0 %v104
    %v106 = vpop.xlane.xlu0 %105
    %v107 = vrcp.pop 32.0
    %v108 = vmul.f32 %v103, %v107
    %v109 = vmul.f32 %v106, %v107
    %v110 = vsub.f32 %v56, %v108
    %v111 = vsub.f32 %v57, %v109
    %v112 = vmul.f32 %v110, %v110
    %v113 = vmul.f32 %v111, %v111
    %v114 = vsel %vm100, %v112, 0.0
    %115 = vadd.xlane.f32.xlu0 %v114
    %v116 = vpop.xlane.xlu0 %115
    %v117 = vsel %vm100, %v113, 0.0
    %118 = vadd.xlane.f32.xlu0 %v117
    %v119 = vpop.xlane.xlu0 %118
    %v120 = vmul.f32 %v116, 0.032258064
    %v121 = vmul.f32 %v119, 0.032258064
    %v122 = vrsqrt.pop %v120
    %v123 = vmul.f32 %v120, %v122
    %vm124 = vcmp.eq.f32.partialorder %v120, inf
    %v125 = vsel %vm124, %v120, %v123
    %vm126 = vcmp.eq.f32.partialorder %v120, 0.0
    %v127 = vand.u32 %v120, 2147483648
    %v128 = vsel %vm126, %v127, %v125
    %v129 = vrsqrt.pop %v121
    %v130 = vmul.f32 %v121, %v129
    %vm131 = vcmp.eq.f32.partialorder %v121, inf
    %v132 = vsel %vm131, %v121, %v130
    %vm133 = vcmp.eq.f32.partialorder %v121, 0.0
    %v134 = vand.u32 %v121, 2147483648
    %v135 = vsel %vm133, %v134, %v132
    %v136 = vlaneseq
    %v137 = vshrl.u32 %v136, 7
    %v138 = vsub.s32 0, %v137
    %v139 = vrot.slane %v92, %v138
    %v140 = vmul.f32 %v139, %v110
    %v141 = vmul.f32 %v139, %v111
    %v142 = vadd.f32 %v128, 1e-06
    %v143 = vadd.f32 %v135, 1e-06
    %v144 = vrcp.pop %v142
    %v145 = vmul.f32 %v140, %v144
    %v146 = vrcp.pop %v143
    %v147 = vmul.f32 %v141, %v146
    %v148 = vlaneseq
    %v149 = vshrl.u32 %v148, 7
    %v150 = vsub.s32 0, %v149
    %v151 = vrot.slane %v93, %v150
    %v152 = vadd.f32 %v145, %v151
    %v153 = vadd.f32 %v147, %v151
    %v154 = vlaneseq
    %v155 = vshrl.u32 %v154, 7
    %v156 = vsub.s32 0, %v155
    %v157 = vrot.slane %v94, %v156
    %v159 = vsel %vm100, %v152, 0
    %v162 = vsel %vm100, %v153, 0
    %164 = vmatprep.subr.mxu0 0.0
    %165 = vmatpush1.msra.mxu0 %v58
    %166 = vmatprep.subr.mxu0 0.0
    %167 = vmatpush1.msra.mxu0 %v59
    %168 = vmatprep.subr.mxu0 0.0
    %169 = vmatpush1.msra.mxu0 %v60
    %170 = vmatprep.subr.mxu0 0.0
    %171 = vmatpush1.msra.mxu0 %v61
    %172 = vmatprep.subr.mxu0 0.0
    %173 = vmatpush1.msra.mxu0 0.0
    %174 = vmatprep.subr.mxu0 0.0
    %175 = vmatpush1.msra.mxu0 0.0
    %176 = vmatprep.subr.mxu0 0.0
    %177 = vmatpush1.msra.mxu0 0.0
    %178 = vmatprep.subr.mxu0 0.0
    %179 = vmatpush1.msra.mxu0 0.0
    %180 = vmatprep.subr.mxu0 0.0
    %181 = vmatpush1.msra.mxu0 0.0
    %182 = vmatprep.subr.mxu0 0.0
    %183 = vmatpush1.msra.mxu0 0.0
    %184 = vmatprep.subr.mxu0 0.0
    %185 = vmatpush1.msra.mxu0 0.0
    %186 = vmatprep.subr.mxu0 0.0
    %187 = vmatpush1.msra.mxu0 0.0
    %188 = vmatprep.subr.mxu0 0.0
    %189 = vmatpush1.msra.mxu0 0.0
    %190 = vmatprep.subr.mxu0 0.0
    %191 = vmatpush1.msra.mxu0 0.0
    %192 = vmatprep.subr.mxu0 0.0
    %193 = vmatpush1.msra.mxu0 0.0
    %194 = vmatprep.subr.mxu0 0.0
    %195 = vmatpush1.msra.mxu0 0.0
    %196 = vmatprep.subr.mxu0 0.0
    %197 = vmatpush1.msra.mxu0 0.0
    %198 = vmatprep.subr.mxu0 0.0
    %199 = vmatpush1.msra.mxu0 0.0
    %200 = vmatprep.subr.mxu0 0.0
    %201 = vmatpush1.msra.mxu0 0.0
    %202 = vmatprep.subr.mxu0 0.0
    %203 = vmatpush1.msra.mxu0 0.0
    %204 = vmatprep.subr.mxu0 0.0
    %205 = vmatpush1.msra.mxu0 0.0
    %206 = vmatprep.subr.mxu0 0.0
    %207 = vmatpush1.msra.mxu0 0.0
    %208 = vmatprep.subr.mxu0 0.0
    %209 = vmatpush1.msra.mxu0 0.0
    %210 = vmatprep.subr.mxu0 0.0
    %211 = vmatpush1.msra.mxu0 0.0
    %212 = vmatprep.subr.mxu0 0.0
    %213 = vmatpush1.msra.mxu0 0.0
    %214 = vmatprep.subr.mxu0 0.0
    %215 = vmatpush1.msra.mxu0 0.0
    %216 = vmatprep.subr.mxu0 0.0
    %217 = vmatpush1.msra.mxu0 0.0
    %218 = vmatprep.subr.mxu0 0.0
    %219 = vmatpush1.msra.mxu0 0.0
    %220 = vmatprep.subr.mxu0 0.0
    %221 = vmatpush1.msra.mxu0 0.0
    %222 = vmatprep.subr.mxu0 0.0
    %223 = vmatpush1.msra.mxu0 0.0
    %224 = vmatprep.subr.mxu0 0.0
    %225 = vmatpush1.msra.mxu0 0.0
    %226 = vmatprep.subr.mxu0 0.0
    %227 = vmatpush1.msra.mxu0 0.0
    %228 = vmatprep.mubr.f32.mxu0 0.0
    %229 = vmatmul.mubr.f32.gmra.mrb[0].mxu0 %v159
    %v230 = vpop.f32.mrb[0].mxu0
    %v231 = vadd.f32 %v157, %v230
    %v232 = vpop.f32.mrb[0].mxu0
    %233 = vmatprep.mubr.f32.mxu0 0.0
    %234 = vmatmul.mubr.f32.gmra.mrb[0].mxu0 %v162
    %v235 = vpop.f32.mrb[0].mxu0
    %v236 = vadd.f32 %v157, %v235
    %v237 = vpop.f32.mrb[0].mxu0
    %238 = vdwg.mxu0
    %v239 = vmul.f32 %v231, 0.35355338
    %v240 = vmul.f32 %v236, 0.35355338
    %249 = vrot.lane.b32.xlu0 %v74, 32
    %v250 = vpop.permute.xlu0 %249
    %251 = vrot.lane.b32.xlu0 %v75, 32
    %v252 = vpop.permute.xlu0 %251
    %253 = vrot.lane.b32.xlu0 %v76, 32
    %v254 = vpop.permute.xlu0 %253
    %255 = vrot.lane.b32.xlu0 %v77, 32
    %v256 = vpop.permute.xlu0 %255
    %257 = vrot.lane.b32.xlu0 %v78, 32
    %v258 = vpop.permute.xlu0 %257
    %259 = vrot.lane.b32.xlu0 %v79, 32
    %v260 = vpop.permute.xlu0 %259
    %261 = vrot.lane.b32.xlu0 %v80, 32
    %v262 = vpop.permute.xlu0 %261
    %263 = vrot.lane.b32.xlu0 %v81, 32
    %v264 = vpop.permute.xlu0 %263
    %v273 = vmul.f32 %v231, %v250
    %v274 = vmul.f32 %v236, %v252
    %v275 = vmul.f32 %v231, %v254
    %v276 = vmul.f32 %v236, %v256
    %v277 = vmul.f32 %v231, %v258
    %v278 = vmul.f32 %v236, %v260
    %v279 = vmul.f32 %v231, %v262
    %v280 = vmul.f32 %v236, %v264
    %281 = vrot.lane.b32.xlu0 %v74, 64
    %v282 = vpop.permute.xlu0 %281
    %283 = vrot.lane.b32.xlu0 %v75, 64
    %v284 = vpop.permute.xlu0 %283
    %285 = vrot.lane.b32.xlu0 %v76, 64
    %v286 = vpop.permute.xlu0 %285
    %287 = vrot.lane.b32.xlu0 %v77, 64
    %v288 = vpop.permute.xlu0 %287
    %289 = vrot.lane.b32.xlu0 %v78, 64
    %v290 = vpop.permute.xlu0 %289
    %291 = vrot.lane.b32.xlu0 %v79, 64
    %v292 = vpop.permute.xlu0 %291
    %293 = vrot.lane.b32.xlu0 %v80, 64
    %v294 = vpop.permute.xlu0 %293
    %295 = vrot.lane.b32.xlu0 %v81, 64
    %v296 = vpop.permute.xlu0 %295
    %v305 = vmul.f32 %v231, %v282
    %v306 = vmul.f32 %v236, %v284
    %v307 = vmul.f32 %v231, %v286
    %v308 = vmul.f32 %v236, %v288
    %v309 = vmul.f32 %v231, %v290
    %v310 = vmul.f32 %v236, %v292
    %v311 = vmul.f32 %v231, %v294
    %v312 = vmul.f32 %v236, %v296
    %321 = vrot.lane.b32.xlu0 %v273, 96
    %v322 = vpop.permute.xlu0 %321
    %323 = vrot.lane.b32.xlu0 %v274, 96
    %v324 = vpop.permute.xlu0 %323
    %325 = vrot.lane.b32.xlu0 %v275, 96
    %v326 = vpop.permute.xlu0 %325
    %327 = vrot.lane.b32.xlu0 %v276, 96
    %v328 = vpop.permute.xlu0 %327
    %329 = vrot.lane.b32.xlu0 %v277, 96
    %v330 = vpop.permute.xlu0 %329
    %331 = vrot.lane.b32.xlu0 %v278, 96
    %v332 = vpop.permute.xlu0 %331
    %333 = vrot.lane.b32.xlu0 %v279, 96
    %v334 = vpop.permute.xlu0 %333
    %335 = vrot.lane.b32.xlu0 %v280, 96
    %v336 = vpop.permute.xlu0 %335
    %v338 = vsel %vm100, %v239, 0
    %v341 = vsel %vm100, %v240, 0
    %v343 = vsel %vm100, %v322, 0
    %v345 = vsel %vm100, %v324, 0
    %v347 = vsel %vm100, %v326, 0
    %v349 = vsel %vm100, %v328, 0
    %v351 = vsel %vm100, %v330, 0
    %v353 = vsel %vm100, %v332, 0
    %v355 = vsel %vm100, %v334, 0
    %v357 = vsel %vm100, %v336, 0
    %359 = vmatprep.subr.mxu0 0.0
    %360 = vmatpush1.xpose.msra.mxu0 %v343
    %361 = vmatprep.subr.mxu0 0.0
    %362 = vmatpush1.xpose.msra.mxu0 %v345
    %363 = vmatprep.subr.mxu0 0.0
    %364 = vmatpush1.xpose.msra.mxu0 %v347
    %365 = vmatprep.subr.mxu0 0.0
    %366 = vmatpush1.xpose.msra.mxu0 %v349
    %367 = vmatprep.subr.mxu0 0.0
    %368 = vmatpush1.xpose.msra.mxu0 %v351
    %369 = vmatprep.subr.mxu0 0.0
    %370 = vmatpush1.xpose.msra.mxu0 %v353
    %371 = vmatprep.subr.mxu0 0.0
    %372 = vmatpush1.xpose.msra.mxu0 %v355
    %373 = vmatprep.subr.mxu0 0.0
    %374 = vmatpush1.xpose.msra.mxu0 %v357
    %375 = vmatprep.subr.mxu0 0.0
    %376 = vmatpush1.xpose.msra.mxu0 0.0
    %377 = vmatprep.subr.mxu0 0.0
    %378 = vmatpush1.xpose.msra.mxu0 0.0
    %379 = vmatprep.subr.mxu0 0.0
    %380 = vmatpush1.xpose.msra.mxu0 0.0
    %381 = vmatprep.subr.mxu0 0.0
    %382 = vmatpush1.xpose.msra.mxu0 0.0
    %383 = vmatprep.subr.mxu0 0.0
    %384 = vmatpush1.xpose.msra.mxu0 0.0
    %385 = vmatprep.subr.mxu0 0.0
    %386 = vmatpush1.xpose.msra.mxu0 0.0
    %387 = vmatprep.subr.mxu0 0.0
    %388 = vmatpush1.xpose.msra.mxu0 0.0
    %389 = vmatprep.subr.mxu0 0.0
    %390 = vmatpush1.xpose.msra.mxu0 0.0
    %391 = vmatprep.subr.mxu0 0.0
    %392 = vmatpush1.xpose.msra.mxu0 0.0
    %393 = vmatprep.subr.mxu0 0.0
    %394 = vmatpush1.xpose.msra.mxu0 0.0
    %395 = vmatprep.subr.mxu0 0.0
    %396 = vmatpush1.xpose.msra.mxu0 0.0
    %397 = vmatprep.subr.mxu0 0.0
    %398 = vmatpush1.xpose.msra.mxu0 0.0
    %399 = vmatprep.subr.mxu0 0.0
    %400 = vmatpush1.xpose.msra.mxu0 0.0
    %401 = vmatprep.subr.mxu0 0.0
    %402 = vmatpush1.xpose.msra.mxu0 0.0
    %403 = vmatprep.subr.mxu0 0.0
    %404 = vmatpush1.xpose.msra.mxu0 0.0
    %405 = vmatprep.subr.mxu0 0.0
    %406 = vmatpush1.xpose.msra.mxu0 0.0
    %407 = vmatprep.subr.mxu0 0.0
    %408 = vmatpush1.xpose.msra.mxu0 0.0
    %409 = vmatprep.subr.mxu0 0.0
    %410 = vmatpush1.xpose.msra.mxu0 0.0
    %411 = vmatprep.subr.mxu0 0.0
    %412 = vmatpush1.xpose.msra.mxu0 0.0
    %413 = vmatprep.subr.mxu0 0.0
    %414 = vmatpush1.xpose.msra.mxu0 0.0
    %415 = vmatprep.subr.mxu0 0.0
    %416 = vmatpush1.xpose.msra.mxu0 0.0
    %417 = vmatprep.subr.mxu0 0.0
    %418 = vmatpush1.xpose.msra.mxu0 0.0
    %419 = vmatprep.subr.mxu0 0.0
    %420 = vmatpush1.xpose.msra.mxu0 0.0
    %421 = vmatprep.subr.mxu0 0.0
    %422 = vmatpush1.xpose.msra.mxu0 0.0
    %423 = vmatprep.mubr.f32.mxu0 0.0
    %424 = vmatmul.mubr.f32.gmra.mrb[0].mxu0 %v338
    %v425 = vpop.f32.mrb[0].mxu0
    %v426 = vadd.f32 %v82, %v425
    %v427 = vpop.f32.mrb[0].mxu0
    %428 = vmatprep.mubr.f32.mxu0 0.0
    %429 = vmatmul.mubr.f32.gmra.mrb[0].mxu0 %v341
    %v430 = vpop.f32.mrb[0].mxu0
    %v431 = vadd.f32 %v83, %v430
    %v432 = vpop.f32.mrb[0].mxu0
    %433 = vdwg.mxu0
    %vm434 = vcmask 523264
    %v435 = vsel %vm434, %v426, -inf
    %436 = vmax.xlane.f32.xlu0 %v435
    %v437 = vpop.xlane.xlu0 %436
    %v438 = vsel %vm434, %v431, -inf
    %439 = vmax.xlane.f32.xlu0 %v438
    %v440 = vpop.xlane.xlu0 %439
    %v441 = vsub.f32 %v426, %v437
    %v442 = vsub.f32 %v431, %v440
    %v443 = vmul.f32 %v441, 1.442695
    %v444 = vpow.pop %v443
    %v445 = vmul.f32 %v442, 1.442695
    %v446 = vpow.pop %v445
    %v448 = vsel %vm434, %v444, 0
    %v451 = vsel %vm434, %v446, 0
    %453 = vmatprep.subr.mxu0 0.0
    %454 = vmatpush1.msra.mxu0 %v84
    %455 = vmatprep.subr.mxu0 0.0
    %456 = vmatpush1.msra.mxu0 %v85
    %457 = vmatprep.subr.mxu0 0.0
    %458 = vmatpush1.msra.mxu0 %v86
    %459 = vmatprep.subr.mxu0 0.0
    %460 = vmatpush1.msra.mxu0 %v87
    %461 = vmatprep.subr.mxu0 0.0
    %462 = vmatpush1.msra.mxu0 %v88
    %463 = vmatprep.subr.mxu0 0.0
    %464 = vmatpush1.msra.mxu0 %v89
    %465 = vmatprep.subr.mxu0 0.0
    %466 = vmatpush1.msra.mxu0 %v90
    %467 = vmatprep.subr.mxu0 0.0
    %468 = vmatpush1.msra.mxu0 %v91
    %469 = vmatprep.subr.mxu0 0.0
    %470 = vmatpush1.msra.mxu0 0.0
    %471 = vmatprep.subr.mxu0 0.0
    %472 = vmatpush1.msra.mxu0 0.0
    %473 = vmatprep.subr.mxu0 0.0
    %474 = vmatpush1.msra.mxu0 0.0
    %475 = vmatprep.subr.mxu0 0.0
    %476 = vmatpush1.msra.mxu0 0.0
    %477 = vmatprep.subr.mxu0 0.0
    %478 = vmatpush1.msra.mxu0 0.0
    %479 = vmatprep.subr.mxu0 0.0
    %480 = vmatpush1.msra.mxu0 0.0
    %481 = vmatprep.subr.mxu0 0.0
    %482 = vmatpush1.msra.mxu0 0.0
    %483 = vmatprep.subr.mxu0 0.0
    %484 = vmatpush1.msra.mxu0 0.0
    %485 = vmatprep.subr.mxu0 0.0
    %486 = vmatpush1.msra.mxu0 0.0
    %487 = vmatprep.subr.mxu0 0.0
    %488 = vmatpush1.msra.mxu0 0.0
    %489 = vmatprep.subr.mxu0 0.0
    %490 = vmatpush1.msra.mxu0 0.0
    %491 = vmatprep.subr.mxu0 0.0
    %492 = vmatpush1.msra.mxu0 0.0
    %493 = vmatprep.subr.mxu0 0.0
    %494 = vmatpush1.msra.mxu0 0.0
    %495 = vmatprep.subr.mxu0 0.0
    %496 = vmatpush1.msra.mxu0 0.0
    %497 = vmatprep.subr.mxu0 0.0
    %498 = vmatpush1.msra.mxu0 0.0
    %499 = vmatprep.subr.mxu0 0.0
    %500 = vmatpush1.msra.mxu0 0.0
    %501 = vmatprep.subr.mxu0 0.0
    %502 = vmatpush1.msra.mxu0 0.0
    %503 = vmatprep.subr.mxu0 0.0
    %504 = vmatpush1.msra.mxu0 0.0
    %505 = vmatprep.subr.mxu0 0.0
    %506 = vmatpush1.msra.mxu0 0.0
    %507 = vmatprep.subr.mxu0 0.0
    %508 = vmatpush1.msra.mxu0 0.0
    %509 = vmatprep.subr.mxu0 0.0
    %510 = vmatpush1.msra.mxu0 0.0
    %511 = vmatprep.subr.mxu0 0.0
    %512 = vmatpush1.msra.mxu0 0.0
    %513 = vmatprep.subr.mxu0 0.0
    %514 = vmatpush1.msra.mxu0 0.0
    %515 = vmatprep.subr.mxu0 0.0
    %516 = vmatpush1.msra.mxu0 0.0
    %517 = vmatprep.mubr.f32.mxu0 0.0
    %518 = vmatmul.mubr.f32.gmra.mrb[0].mxu0 %v448
    %v519 = vpop.f32.mrb[0].mxu0
    %v520 = vadd.f32 0.0, %v519
    %v521 = vpop.f32.mrb[0].mxu0
    %522 = vmatprep.mubr.f32.mxu0 0.0
    %523 = vmatmul.mubr.f32.gmra.mrb[0].mxu0 %v451
    %v524 = vpop.f32.mrb[0].mxu0
    %v525 = vadd.f32 0.0, %v524
    %v526 = vpop.f32.mrb[0].mxu0
    %527 = vdwg.mxu0
    %v528 = vrcp.pop %v520
    %v529 = vmul.f32 1.0, %v528
    %v530 = vrcp.pop %v525
    %v531 = vmul.f32 1.0, %v530
    %vm532 = vcmask 31744
    %v534 = vsel %vm532, %v529, 0
    %v537 = vsel %vm532, %v531, 0
    %v540 = vsel %vm532, %v84, 0
    %v543 = vsel %vm532, %v85, 0
    %v546 = vsel %vm532, %v86, 0
    %v549 = vsel %vm532, %v87, 0
    %v552 = vsel %vm532, %v88, 0
    %v555 = vsel %vm532, %v89, 0
    %v558 = vsel %vm532, %v90, 0
    %v561 = vsel %vm532, %v91, 0
    %563 = vmatprep.subr.mxu0 0.0
    %564 = vmatpush1.xpose.msra.mxu0 %v540
    %565 = vmatprep.subr.mxu0 0.0
    %566 = vmatpush1.xpose.msra.mxu0 %v543
    %567 = vmatprep.subr.mxu0 0.0
    %568 = vmatpush1.xpose.msra.mxu0 %v546
    %569 = vmatprep.subr.mxu0 0.0
    %570 = vmatpush1.xpose.msra.mxu0 %v549
    %571 = vmatprep.subr.mxu0 0.0
    %572 = vmatpush1.xpose.msra.mxu0 %v552
    %573 = vmatprep.subr.mxu0 0.0
    %574 = vmatpush1.xpose.msra.mxu0 %v555
    %575 = vmatprep.subr.mxu0 0.0
    %576 = vmatpush1.xpose.msra.mxu0 %v558
    %577 = vmatprep.subr.mxu0 0.0
    %578 = vmatpush1.xpose.msra.mxu0 %v561
    %579 = vmatprep.subr.mxu0 0.0
    %580 = vmatpush1.xpose.msra.mxu0 0.0
    %581 = vmatprep.subr.mxu0 0.0
    %582 = vmatpush1.xpose.msra.mxu0 0.0
    %583 = vmatprep.subr.mxu0 0.0
    %584 = vmatpush1.xpose.msra.mxu0 0.0
    %585 = vmatprep.subr.mxu0 0.0
    %586 = vmatpush1.xpose.msra.mxu0 0.0
    %587 = vmatprep.subr.mxu0 0.0
    %588 = vmatpush1.xpose.msra.mxu0 0.0
    %589 = vmatprep.subr.mxu0 0.0
    %590 = vmatpush1.xpose.msra.mxu0 0.0
    %591 = vmatprep.subr.mxu0 0.0
    %592 = vmatpush1.xpose.msra.mxu0 0.0
    %593 = vmatprep.subr.mxu0 0.0
    %594 = vmatpush1.xpose.msra.mxu0 0.0
    %595 = vmatprep.subr.mxu0 0.0
    %596 = vmatpush1.xpose.msra.mxu0 0.0
    %597 = vmatprep.subr.mxu0 0.0
    %598 = vmatpush1.xpose.msra.mxu0 0.0
    %599 = vmatprep.subr.mxu0 0.0
    %600 = vmatpush1.xpose.msra.mxu0 0.0
    %601 = vmatprep.subr.mxu0 0.0
    %602 = vmatpush1.xpose.msra.mxu0 0.0
    %603 = vmatprep.subr.mxu0 0.0
    %604 = vmatpush1.xpose.msra.mxu0 0.0
    %605 = vmatprep.subr.mxu0 0.0
    %606 = vmatpush1.xpose.msra.mxu0 0.0
    %607 = vmatprep.subr.mxu0 0.0
    %608 = vmatpush1.xpose.msra.mxu0 0.0
    %609 = vmatprep.subr.mxu0 0.0
    %610 = vmatpush1.xpose.msra.mxu0 0.0
    %611 = vmatprep.subr.mxu0 0.0
    %612 = vmatpush1.xpose.msra.mxu0 0.0
    %613 = vmatprep.subr.mxu0 0.0
    %614 = vmatpush1.xpose.msra.mxu0 0.0
    %615 = vmatprep.subr.mxu0 0.0
    %616 = vmatpush1.xpose.msra.mxu0 0.0
    %617 = vmatprep.subr.mxu0 0.0
    %618 = vmatpush1.xpose.msra.mxu0 0.0
    %619 = vmatprep.subr.mxu0 0.0
    %620 = vmatpush1.xpose.msra.mxu0 0.0
    %621 = vmatprep.subr.mxu0 0.0
    %622 = vmatpush1.xpose.msra.mxu0 0.0
    %623 = vmatprep.subr.mxu0 0.0
    %624 = vmatpush1.xpose.msra.mxu0 0.0
    %625 = vmatprep.subr.mxu0 0.0
    %626 = vmatpush1.xpose.msra.mxu0 0.0
    %627 = vmatprep.mubr.f32.mxu0 0.0
    %628 = vmatmul.mubr.f32.gmra.mrb[0].mxu0 %v534
    %v629 = vpop.f32.mrb[0].mxu0
    %v630 = vadd.f32 0.0, %v629
    %v631 = vpop.f32.mrb[0].mxu0
    %632 = vmatprep.mubr.f32.mxu0 0.0
    %633 = vmatmul.mubr.f32.gmra.mrb[0].mxu0 %v537
    %v634 = vpop.f32.mrb[0].mxu0
    %v635 = vadd.f32 0.0, %v634
    %v636 = vpop.f32.mrb[0].mxu0
    %637 = vdwg.mxu0
    %v638 = vmul.f32 %v444, %v630
    %v639 = vmul.f32 %v446, %v635
    %648 = vrot.lane.b32.xlu0 %v305, 64
    %v649 = vpop.permute.xlu0 %648
    %650 = vrot.lane.b32.xlu0 %v306, 64
    %v651 = vpop.permute.xlu0 %650
    %652 = vrot.lane.b32.xlu0 %v307, 64
    %v653 = vpop.permute.xlu0 %652
    %654 = vrot.lane.b32.xlu0 %v308, 64
    %v655 = vpop.permute.xlu0 %654
    %656 = vrot.lane.b32.xlu0 %v309, 64
    %v657 = vpop.permute.xlu0 %656
    %658 = vrot.lane.b32.xlu0 %v310, 64
    %v659 = vpop.permute.xlu0 %658
    %660 = vrot.lane.b32.xlu0 %v311, 64
    %v661 = vpop.permute.xlu0 %660
    %662 = vrot.lane.b32.xlu0 %v312, 64
    %v663 = vpop.permute.xlu0 %662
    %v673 = vsel %vm434, %v638, 0
    %v676 = vsel %vm434, %v639, 0
    %678 = vmatprep.subr.mxu0 0.0
    %679 = vmatpush1.msra.mxu0 %v649
    %680 = vmatprep.subr.mxu0 0.0
    %681 = vmatpush1.msra.mxu0 %v651
    %682 = vmatprep.subr.mxu0 0.0
    %683 = vmatpush1.msra.mxu0 %v653
    %684 = vmatprep.subr.mxu0 0.0
    %685 = vmatpush1.msra.mxu0 %v655
    %686 = vmatprep.subr.mxu0 0.0
    %687 = vmatpush1.msra.mxu0 %v657
    %688 = vmatprep.subr.mxu0 0.0
    %689 = vmatpush1.msra.mxu0 %v659
    %690 = vmatprep.subr.mxu0 0.0
    %691 = vmatpush1.msra.mxu0 %v661
    %692 = vmatprep.subr.mxu0 0.0
    %693 = vmatpush1.msra.mxu0 %v663
    %694 = vmatprep.subr.mxu0 0.0
    %695 = vmatpush1.msra.mxu0 0.0
    %696 = vmatprep.subr.mxu0 0.0
    %697 = vmatpush1.msra.mxu0 0.0
    %698 = vmatprep.subr.mxu0 0.0
    %699 = vmatpush1.msra.mxu0 0.0
    %700 = vmatprep.subr.mxu0 0.0
    %701 = vmatpush1.msra.mxu0 0.0
    %702 = vmatprep.subr.mxu0 0.0
    %703 = vmatpush1.msra.mxu0 0.0
    %704 = vmatprep.subr.mxu0 0.0
    %705 = vmatpush1.msra.mxu0 0.0
    %706 = vmatprep.subr.mxu0 0.0
    %707 = vmatpush1.msra.mxu0 0.0
    %708 = vmatprep.subr.mxu0 0.0
    %709 = vmatpush1.msra.mxu0 0.0
    %710 = vmatprep.subr.mxu0 0.0
    %711 = vmatpush1.msra.mxu0 0.0
    %712 = vmatprep.subr.mxu0 0.0
    %713 = vmatpush1.msra.mxu0 0.0
    %714 = vmatprep.subr.mxu0 0.0
    %715 = vmatpush1.msra.mxu0 0.0
    %716 = vmatprep.subr.mxu0 0.0
    %717 = vmatpush1.msra.mxu0 0.0
    %718 = vmatprep.subr.mxu0 0.0
    %719 = vmatpush1.msra.mxu0 0.0
    %720 = vmatprep.subr.mxu0 0.0
    %721 = vmatpush1.msra.mxu0 0.0
    %722 = vmatprep.subr.mxu0 0.0
    %723 = vmatpush1.msra.mxu0 0.0
    %724 = vmatprep.subr.mxu0 0.0
    %725 = vmatpush1.msra.mxu0 0.0
    %726 = vmatprep.subr.mxu0 0.0
    %727 = vmatpush1.msra.mxu0 0.0
    %728 = vmatprep.subr.mxu0 0.0
    %729 = vmatpush1.msra.mxu0 0.0
    %730 = vmatprep.subr.mxu0 0.0
    %731 = vmatpush1.msra.mxu0 0.0
    %732 = vmatprep.subr.mxu0 0.0
    %733 = vmatpush1.msra.mxu0 0.0
    %734 = vmatprep.subr.mxu0 0.0
    %735 = vmatpush1.msra.mxu0 0.0
    %736 = vmatprep.subr.mxu0 0.0
    %737 = vmatpush1.msra.mxu0 0.0
    %738 = vmatprep.subr.mxu0 0.0
    %739 = vmatpush1.msra.mxu0 0.0
    %740 = vmatprep.subr.mxu0 0.0
    %741 = vmatpush1.msra.mxu0 0.0
    %742 = vmatprep.mubr.f32.mxu0 0.0
    %743 = vmatmul.mubr.f32.gmra.mrb[0].mxu0 %v673
    %v744 = vpop.f32.mrb[0].mxu0
    %v745 = vadd.f32 0.0, %v744
    %v746 = vpop.f32.mrb[0].mxu0
    %747 = vmatprep.mubr.f32.mxu0 0.0
    %748 = vmatmul.mubr.f32.gmra.mrb[0].mxu0 %v676
    %v749 = vpop.f32.mrb[0].mxu0
    %v750 = vadd.f32 0.0, %v749
    %v751 = vpop.f32.mrb[0].mxu0
    %752 = vdwg.mxu0
    %v753 = vlaneseq
    %v754 = vshrl.u32 %v753, 7
    %v755 = vsub.s32 0, %v754
    %v756 = vrot.slane %v95, %v755
    %v758 = vsel %vm100, %v745, 0
    %v761 = vsel %vm100, %v750, 0
    %763 = vmatprep.subr.mxu0 0.0
    %764 = vmatpush1.msra.mxu0 %v62
    %765 = vmatprep.subr.mxu0 0.0
    %766 = vmatpush1.msra.mxu0 %v63
    %767 = vmatprep.subr.mxu0 0.0
    %768 = vmatpush1.msra.mxu0 %v64
    %769 = vmatprep.subr.mxu0 0.0
    %770 = vmatpush1.msra.mxu0 %v65
    %771 = vmatprep.subr.mxu0 0.0
    %772 = vmatpush1.msra.mxu0 0.0
    %773 = vmatprep.subr.mxu0 0.0
    %774 = vmatpush1.msra.mxu0 0.0
    %775 = vmatprep.subr.mxu0 0.0
    %776 = vmatpush1.msra.mxu0 0.0
    %777 = vmatprep.subr.mxu0 0.0
    %778 = vmatpush1.msra.mxu0 0.0
    %779 = vmatprep.subr.mxu0 0.0
    %780 = vmatpush1.msra.mxu0 0.0
    %781 = vmatprep.subr.mxu0 0.0
    %782 = vmatpush1.msra.mxu0 0.0
    %783 = vmatprep.subr.mxu0 0.0
    %784 = vmatpush1.msra.mxu0 0.0
    %785 = vmatprep.subr.mxu0 0.0
    %786 = vmatpush1.msra.mxu0 0.0
    %787 = vmatprep.subr.mxu0 0.0
    %788 = vmatpush1.msra.mxu0 0.0
    %789 = vmatprep.subr.mxu0 0.0
    %790 = vmatpush1.msra.mxu0 0.0
    %791 = vmatprep.subr.mxu0 0.0
    %792 = vmatpush1.msra.mxu0 0.0
    %793 = vmatprep.subr.mxu0 0.0
    %794 = vmatpush1.msra.mxu0 0.0
    %795 = vmatprep.subr.mxu0 0.0
    %796 = vmatpush1.msra.mxu0 0.0
    %797 = vmatprep.subr.mxu0 0.0
    %798 = vmatpush1.msra.mxu0 0.0
    %799 = vmatprep.subr.mxu0 0.0
    %800 = vmatpush1.msra.mxu0 0.0
    %801 = vmatprep.subr.mxu0 0.0
    %802 = vmatpush1.msra.mxu0 0.0
    %803 = vmatprep.subr.mxu0 0.0
    %804 = vmatpush1.msra.mxu0 0.0
    %805 = vmatprep.subr.mxu0 0.0
    %806 = vmatpush1.msra.mxu0 0.0
    %807 = vmatprep.subr.mxu0 0.0
    %808 = vmatpush1.msra.mxu0 0.0
    %809 = vmatprep.subr.mxu0 0.0
    %810 = vmatpush1.msra.mxu0 0.0
    %811 = vmatprep.subr.mxu0 0.0
    %812 = vmatpush1.msra.mxu0 0.0
    %813 = vmatprep.subr.mxu0 0.0
    %814 = vmatpush1.msra.mxu0 0.0
    %815 = vmatprep.subr.mxu0 0.0
    %816 = vmatpush1.msra.mxu0 0.0
    %817 = vmatprep.subr.mxu0 0.0
    %818 = vmatpush1.msra.mxu0 0.0
    %819 = vmatprep.subr.mxu0 0.0
    %820 = vmatpush1.msra.mxu0 0.0
    %821 = vmatprep.subr.mxu0 0.0
    %822 = vmatpush1.msra.mxu0 0.0
    %823 = vmatprep.subr.mxu0 0.0
    %824 = vmatpush1.msra.mxu0 0.0
    %825 = vmatprep.subr.mxu0 0.0
    %826 = vmatpush1.msra.mxu0 0.0
    %827 = vmatprep.mubr.f32.mxu0 0.0
    %828 = vmatmul.mubr.f32.gmra.mrb[0].mxu0 %v758
    %v829 = vpop.f32.mrb[0].mxu0
    %v830 = vadd.f32 %v756, %v829
    %v831 = vpop.f32.mrb[0].mxu0
    %832 = vmatprep.mubr.f32.mxu0 0.0
    %833 = vmatmul.mubr.f32.gmra.mrb[0].mxu0 %v761
    %v834 = vpop.f32.mrb[0].mxu0
    %v835 = vadd.f32 %v756, %v834
    %v836 = vpop.f32.mrb[0].mxu0
    %837 = vdwg.mxu0
    %v838 = vadd.f32 %v56, %v830
    %v839 = vadd.f32 %v57, %v835
    %v840 = vsel %vm100, %v838, 0.0
    %841 = vadd.xlane.f32.xlu0 %v840
    %v842 = vpop.xlane.xlu0 %841
    %v843 = vsel %vm100, %v839, 0.0
    %844 = vadd.xlane.f32.xlu0 %v843
    %v845 = vpop.xlane.xlu0 %844
    %v846 = vmul.f32 %v842, %v107
    %v847 = vmul.f32 %v845, %v107
    %v848 = vsub.f32 %v838, %v846
    %v849 = vsub.f32 %v839, %v847
    %v850 = vmul.f32 %v848, %v848
    %v851 = vmul.f32 %v849, %v849
    %v852 = vsel %vm100, %v850, 0.0
    %853 = vadd.xlane.f32.xlu0 %v852
    %v854 = vpop.xlane.xlu0 %853
    %v855 = vsel %vm100, %v851, 0.0
    %856 = vadd.xlane.f32.xlu0 %v855
    %v857 = vpop.xlane.xlu0 %856
    %v858 = vmul.f32 %v854, 0.032258064
    %v859 = vmul.f32 %v857, 0.032258064
    %v860 = vrsqrt.pop %v858
    %v861 = vmul.f32 %v858, %v860
    %vm862 = vcmp.eq.f32.partialorder %v858, inf
    %v863 = vsel %vm862, %v858, %v861
    %vm864 = vcmp.eq.f32.partialorder %v858, 0.0
    %v865 = vand.u32 %v858, 2147483648
    %v866 = vsel %vm864, %v865, %v863
    %v867 = vrsqrt.pop %v859
    %v868 = vmul.f32 %v859, %v867
    %vm869 = vcmp.eq.f32.partialorder %v859, inf
    %v870 = vsel %vm869, %v859, %v868
    %vm871 = vcmp.eq.f32.partialorder %v859, 0.0
    %v872 = vand.u32 %v859, 2147483648
    %v873 = vsel %vm871, %v872, %v870
    %v874 = vlaneseq
    %v875 = vshrl.u32 %v874, 7
    %v876 = vsub.s32 0, %v875
    %v877 = vrot.slane %v96, %v876
    %v878 = vmul.f32 %v877, %v848
    %v879 = vmul.f32 %v877, %v849
    %v880 = vadd.f32 %v866, 1e-06
    %v881 = vadd.f32 %v873, 1e-06
    %v882 = vrcp.pop %v880
    %v883 = vmul.f32 %v878, %v882
    %v884 = vrcp.pop %v881
    %v885 = vmul.f32 %v879, %v884
    %v886 = vlaneseq
    %v887 = vshrl.u32 %v886, 7
    %v888 = vsub.s32 0, %v887
    %v889 = vrot.slane %v97, %v888
    %v890 = vadd.f32 %v883, %v889
    %v891 = vadd.f32 %v885, %v889
    %v892 = vlaneseq
    %v893 = vshrl.u32 %v892, 7
    %v894 = vsub.s32 0, %v893
    %v895 = vrot.slane %v98, %v894
    %v897 = vsel %vm100, %v890, 0
    %v900 = vsel %vm100, %v891, 0
    %902 = vmatprep.subr.mxu0 0.0
    %903 = vmatpush1.msra.mxu0 %v66
    %904 = vmatprep.subr.mxu0 0.0
    %905 = vmatpush1.msra.mxu0 %v67
    %906 = vmatprep.subr.mxu0 0.0
    %907 = vmatpush1.msra.mxu0 %v68
    %908 = vmatprep.subr.mxu0 0.0
    %909 = vmatpush1.msra.mxu0 %v69
    %910 = vmatprep.subr.mxu0 0.0
    %911 = vmatpush1.msra.mxu0 0.0
    %912 = vmatprep.subr.mxu0 0.0
    %913 = vmatpush1.msra.mxu0 0.0
    %914 = vmatprep.subr.mxu0 0.0
    %915 = vmatpush1.msra.mxu0 0.0
    %916 = vmatprep.subr.mxu0 0.0
    %917 = vmatpush1.msra.mxu0 0.0
    %918 = vmatprep.subr.mxu0 0.0
    %919 = vmatpush1.msra.mxu0 0.0
    %920 = vmatprep.subr.mxu0 0.0
    %921 = vmatpush1.msra.mxu0 0.0
    %922 = vmatprep.subr.mxu0 0.0
    %923 = vmatpush1.msra.mxu0 0.0
    %924 = vmatprep.subr.mxu0 0.0
    %925 = vmatpush1.msra.mxu0 0.0
    %926 = vmatprep.subr.mxu0 0.0
    %927 = vmatpush1.msra.mxu0 0.0
    %928 = vmatprep.subr.mxu0 0.0
    %929 = vmatpush1.msra.mxu0 0.0
    %930 = vmatprep.subr.mxu0 0.0
    %931 = vmatpush1.msra.mxu0 0.0
    %932 = vmatprep.subr.mxu0 0.0
    %933 = vmatpush1.msra.mxu0 0.0
    %934 = vmatprep.subr.mxu0 0.0
    %935 = vmatpush1.msra.mxu0 0.0
    %936 = vmatprep.subr.mxu0 0.0
    %937 = vmatpush1.msra.mxu0 0.0
    %938 = vmatprep.subr.mxu0 0.0
    %939 = vmatpush1.msra.mxu0 0.0
    %940 = vmatprep.subr.mxu0 0.0
    %941 = vmatpush1.msra.mxu0 0.0
    %942 = vmatprep.subr.mxu0 0.0
    %943 = vmatpush1.msra.mxu0 0.0
    %944 = vmatprep.subr.mxu0 0.0
    %945 = vmatpush1.msra.mxu0 0.0
    %946 = vmatprep.subr.mxu0 0.0
    %947 = vmatpush1.msra.mxu0 0.0
    %948 = vmatprep.subr.mxu0 0.0
    %949 = vmatpush1.msra.mxu0 0.0
    %950 = vmatprep.subr.mxu0 0.0
    %951 = vmatpush1.msra.mxu0 0.0
    %952 = vmatprep.subr.mxu0 0.0
    %953 = vmatpush1.msra.mxu0 0.0
    %954 = vmatprep.subr.mxu0 0.0
    %955 = vmatpush1.msra.mxu0 0.0
    %956 = vmatprep.subr.mxu0 0.0
    %957 = vmatpush1.msra.mxu0 0.0
    %958 = vmatprep.subr.mxu0 0.0
    %959 = vmatpush1.msra.mxu0 0.0
    %960 = vmatprep.subr.mxu0 0.0
    %961 = vmatpush1.msra.mxu0 0.0
    %962 = vmatprep.subr.mxu0 0.0
    %963 = vmatpush1.msra.mxu0 0.0
    %964 = vmatprep.subr.mxu0 0.0
    %965 = vmatpush1.msra.mxu0 0.0
    %966 = vmatprep.mubr.f32.mxu0 0.0
    %967 = vmatmul.mubr.f32.gmra.mrb[0].mxu0 %v897
    %v968 = vpop.f32.mrb[0].mxu0
    %v969 = vadd.f32 %v895, %v968
    %v970 = vpop.f32.mrb[0].mxu0
    %971 = vmatprep.mubr.f32.mxu0 0.0
    %972 = vmatmul.mubr.f32.gmra.mrb[0].mxu0 %v900
    %v973 = vpop.f32.mrb[0].mxu0
    %v974 = vadd.f32 %v895, %v973
    %v975 = vpop.f32.mrb[0].mxu0
    %976 = vdwg.mxu0
    %v977 = vmax.f32 %v969, 0.0
    %v978 = vmax.f32 %v974, 0.0
    %v979 = vlaneseq
    %v980 = vshrl.u32 %v979, 7
    %v981 = vsub.s32 0, %v980
    %v982 = vrot.slane %v99, %v981
    %v984 = vsel %vm434, %v977, 0
    %v987 = vsel %vm434, %v978, 0
    %v990 = vsel %vm434, %v70, 0
    %v993 = vsel %vm434, %v71, 0
    %v996 = vsel %vm434, %v72, 0
    %v999 = vsel %vm434, %v73, 0
    %1001 = vmatprep.subr.mxu0 0.0
    %1002 = vmatpush1.xpose.msra.mxu0 %v990
    %1003 = vmatprep.subr.mxu0 0.0
    %1004 = vmatpush1.xpose.msra.mxu0 %v993
    %1005 = vmatprep.subr.mxu0 0.0
    %1006 = vmatpush1.xpose.msra.mxu0 %v996
    %1007 = vmatprep.subr.mxu0 0.0
    %1008 = vmatpush1.xpose.msra.mxu0 %v999
    %1009 = vmatprep.subr.mxu0 0.0
    %1010 = vmatpush1.xpose.msra.mxu0 0.0
    %1011 = vmatprep.subr.mxu0 0.0
    %1012 = vmatpush1.xpose.msra.mxu0 0.0
    %1013 = vmatprep.subr.mxu0 0.0
    %1014 = vmatpush1.xpose.msra.mxu0 0.0
    %1015 = vmatprep.subr.mxu0 0.0
    %1016 = vmatpush1.xpose.msra.mxu0 0.0
    %1017 = vmatprep.subr.mxu0 0.0
    %1018 = vmatpush1.xpose.msra.mxu0 0.0
    %1019 = vmatprep.subr.mxu0 0.0
    %1020 = vmatpush1.xpose.msra.mxu0 0.0
    %1021 = vmatprep.subr.mxu0 0.0
    %1022 = vmatpush1.xpose.msra.mxu0 0.0
    %1023 = vmatprep.subr.mxu0 0.0
    %1024 = vmatpush1.xpose.msra.mxu0 0.0
    %1025 = vmatprep.subr.mxu0 0.0
    %1026 = vmatpush1.xpose.msra.mxu0 0.0
    %1027 = vmatprep.subr.mxu0 0.0
    %1028 = vmatpush1.xpose.msra.mxu0 0.0
    %1029 = vmatprep.subr.mxu0 0.0
    %1030 = vmatpush1.xpose.msra.mxu0 0.0
    %1031 = vmatprep.subr.mxu0 0.0
    %1032 = vmatpush1.xpose.msra.mxu0 0.0
    %1033 = vmatprep.subr.mxu0 0.0
    %1034 = vmatpush1.xpose.msra.mxu0 0.0
    %1035 = vmatprep.subr.mxu0 0.0
    %1036 = vmatpush1.xpose.msra.mxu0 0.0
    %1037 = vmatprep.subr.mxu0 0.0
    %1038 = vmatpush1.xpose.msra.mxu0 0.0
    %1039 = vmatprep.subr.mxu0 0.0
    %1040 = vmatpush1.xpose.msra.mxu0 0.0
    %1041 = vmatprep.subr.mxu0 0.0
    %1042 = vmatpush1.xpose.msra.mxu0 0.0
    %1043 = vmatprep.subr.mxu0 0.0
    %1044 = vmatpush1.xpose.msra.mxu0 0.0
    %1045 = vmatprep.subr.mxu0 0.0
    %1046 = vmatpush1.xpose.msra.mxu0 0.0
    %1047 = vmatprep.subr.mxu0 0.0
    %1048 = vmatpush1.xpose.msra.mxu0 0.0
    %1049 = vmatprep.subr.mxu0 0.0
    %1050 = vmatpush1.xpose.msra.mxu0 0.0
    %1051 = vmatprep.subr.mxu0 0.0
    %1052 = vmatpush1.xpose.msra.mxu0 0.0
    %1053 = vmatprep.subr.mxu0 0.0
    %1054 = vmatpush1.xpose.msra.mxu0 0.0
    %1055 = vmatprep.subr.mxu0 0.0
    %1056 = vmatpush1.xpose.msra.mxu0 0.0
    %1057 = vmatprep.subr.mxu0 0.0
    %1058 = vmatpush1.xpose.msra.mxu0 0.0
    %1059 = vmatprep.subr.mxu0 0.0
    %1060 = vmatpush1.xpose.msra.mxu0 0.0
    %1061 = vmatprep.subr.mxu0 0.0
    %1062 = vmatpush1.xpose.msra.mxu0 0.0
    %1063 = vmatprep.subr.mxu0 0.0
    %1064 = vmatpush1.xpose.msra.mxu0 0.0
    %1065 = vmatprep.mubr.f32.mxu0 0.0
    %1066 = vmatmul.mubr.f32.gmra.mrb[0].mxu0 %v984
    %v1067 = vpop.f32.mrb[0].mxu0
    %v1068 = vadd.f32 %v982, %v1067
    %v1069 = vpop.f32.mrb[0].mxu0
    %1070 = vmatprep.mubr.f32.mxu0 0.0
    %1071 = vmatmul.mubr.f32.gmra.mrb[0].mxu0 %v987
    %v1072 = vpop.f32.mrb[0].mxu0
    %v1073 = vadd.f32 %v982, %v1072
    %v1074 = vpop.f32.mrb[0].mxu0
    %1075 = vdwg.mxu0
    %v1076 = vadd.f32 %v838, %v1068
    %v1077 = vadd.f32 %v839, %v1073
    %1078 = vst.msk [vmem:[#allocation8] sm:$0xff] %vm100, %v1076
    %1079 = vst.msk [vmem:[#allocation8 + $0x8] sm:$0xff] %vm100, %v1077
    // Predicated region
    $region26: #{tpu_custom_call.1} parent=1 // pred_check
      _
    $region27: #{tpu_custom_call.1} parent=1 // pred_check_branch
      %1081 = sbr.rel (0) target = $region29
    $region28: #{tpu_custom_call.1} parent=1 // pred_region
      %s1083 = ssub.s32 256, 256
      %1084 = vsyncadd [#allocation4], %s1083
      %s1085 = sshll.u32 [#allocation8], 4
      %s1086 = int_to_ptr.vmem [resolvable:$true] %s1085
      %1091 = dma.vmem_to_hbm [thread:$0]  %s1086, 256, %s3, [#allocation4], 128, 128, 8
    $region29: #{tpu_custom_call.1} parent=1 // pred_fallthru
      _
    // Predicated region
    $region30: #{tpu_custom_call.1} parent=1 // pred_check
      _
    $region31: #{tpu_custom_call.1} parent=1 // pred_check_branch
      %1093 = sbr.rel (0) target = $region33
    $region32: #{tpu_custom_call.1} parent=1 // pred_region
      %1094 = dma.done [#allocation4], 256
    $region33: #{tpu_custom_call.1} parent=1 // pred_fallthru
      _
    %1095 = vsyncpa [#allocation3], 1
    %1096 = vsyncpa [#allocation6], 1
    %1097 = vsyncpa [#allocation4], 1

</llo_original>
